<compile_context>
chip_gen: v7x
topology: tpu7x:2x2x1
jax: 0.10.0
libtpu: 0.0.40
codegen_flags: <defaults>
</compile_context>

<pallas_src>
import jax
import jax.numpy as jnp
from jax.experimental import pallas as pl
from jax.experimental.pallas import tpu as pltpu


# -----------------------------------------------------------------------------
# Kernel
# -----------------------------------------------------------------------------
def _crop_split_gt_kernel(fetch_ref, live_ref, y1_ref, y2_ref, data_ref, out_ref):
    i = pl.program_id(1)                 # row-tile index (grid axis 1)
    th = out_ref.shape[0]
    row0 = i * th

    @pl.when(live_ref[i] != 0)
    def _():
        # (th, 1) row iota broadcast against (1, tl) per-lane y bounds.
        hh = jax.lax.broadcasted_iota(jnp.int32, (th, 1), 0) + row0
        inside = (hh >= y1_ref[...]) & (hh <= y2_ref[...])
        out_ref[...] = jnp.where(inside, data_ref[...],
                                 jnp.zeros((), out_ref.dtype))

    @pl.when(live_ref[i] == 0)
    def _():
        # Dead tile: no row intersects any ROI's y-band; data block was not
        # (re-)fetched, just write zeros.
        out_ref[...] = jnp.zeros(out_ref.shape, out_ref.dtype)


# -----------------------------------------------------------------------------
# Tiling heuristics
# -----------------------------------------------------------------------------
def _round_down(x, m):
    return (x // m) * m


def _hw_params():
    """(vmem_capacity_bytes, two_tensorcores) with safe fallbacks."""
    vmem_cap = 64 << 20                       # conservative default = v7x per-TC
    try:
        info = pltpu.get_tpu_info()
        cap = int(getattr(info, "vmem_capacity_bytes", 0))
        if cap > 0:
            vmem_cap = cap
    except Exception:
        pass
    two_cores = False
    try:
        kind = jax.devices()[0].device_kind.lower()
        two_cores = "v7" in kind              # v7x: 2 TensorCores share HBM
    except Exception:
        pass
    return vmem_cap, two_cores


def _choose_tiles(H, L, itemsize, vmem_budget, two_cores):
    """Pick (th, tl) block shape for the (H, L) view."""
    row_align = {1: 32, 2: 16}.get(itemsize, 8)   # sublane packing per dtype
    TARGET = 4 << 20                              # sweet-spot block size
    MIN_NICE = 1 << 20                            # don't shrink below this willingly
    min_steps = 4 if two_cores else 2             # megacore vs single-TC

    # Per-block ceiling: 4 double-buffered blocks + aux must fit the budget, and
    # >8 MiB blocks buy no extra HBM BW on any generation.
    max_block = max(256 << 10, min(vmem_budget // 5, 8 << 20))
    blk_target = min(TARGET, max_block)

    # Lane tile: keep the full lane-dense width unless even a minimal row slab
    # would exceed the per-block ceiling (huge W*N case).
    if L <= 128 or min(H, row_align) * L * itemsize <= max_block:
        tl = L
    else:
        tl = max(128, _round_down(max_block // (row_align * itemsize), 128))
        tl = min(tl, L)

    # Row tile: ~blk_target bytes, sublane aligned (or full H).
    lane_bytes = min(tl, L) * itemsize
    th_raw = min(H, max(row_align, blk_target // max(lane_bytes, 1)))
    th = H if th_raw >= H else max(row_align, _round_down(th_raw, row_align))
    th = min(th, H)

    # Ensure enough grid steps for pipelining / megacore, preferring not to drop
    # blocks below ~1 MiB (split lanes instead) unless forced.
    while pl.cdiv(H, th) * pl.cdiv(L, tl) < min_steps:
        half_th = _round_down(th // 2, row_align)
        if half_th >= row_align and half_th * min(tl, L) * itemsize >= MIN_NICE:
            th = half_th
        elif tl >= 256:
            tl = max(128, _round_down(pl.cdiv(tl, 2), 128))
        elif half_th >= row_align:
            th = half_th
        else:
            break

    # v7x: prefer an even total step count so the two TensorCores stay balanced.
    if two_cores:
        n_lane = pl.cdiv(L, tl)
        if (pl.cdiv(H, th) * n_lane) % 2 == 1 and th > row_align:
            floor_t = max(row_align, _round_down(th // 2, row_align))
            t = th - row_align
            while t >= floor_t:
                if (pl.cdiv(H, t) * n_lane) % 2 == 0:
                    th = t
                    break
                t -= row_align

    return th, tl


# -----------------------------------------------------------------------------
# Wrapper
# -----------------------------------------------------------------------------
def crop_split_gt(data, rois, c=2):
    """Pallas implementation of CropSplitGT.forward.

    data: (H, W, N) floating point
    rois: (N, 4) float32  (x1, y1, x2, y2)
    c:    unused by the GT forward pass (API parity with the CUDA op).
    """
    del c  # not used by the GT crop kernel (matches reference CUDA)
    H, W, N = data.shape
    assert rois.shape == (N, 4), f"rois must be (N, 4), got {rois.shape}"

    L = W * N
    dtype = jnp.dtype(data.dtype)
    itemsize = dtype.itemsize

    vmem_cap, two_cores = _hw_params()
    budget = (int(vmem_cap) * 3) // 4            # leave >=25% VMEM for Mosaic
    th, tl = _choose_tiles(H, L, itemsize, budget, two_cores)
    n_row = pl.cdiv(H, th)
    n_lane = pl.cdiv(L, tl)

    # C-style truncation toward zero (matches `int roi_x1 = rois[0]` in CUDA).
    r = rois.astype(jnp.float32).astype(jnp.int32)            # (N, 4)
    x1, y1, x2, y2 = r[:, 0], r[:, 1], r[:, 2], r[:, 3]

    # Fold the column test into per-lane y bounds: lane l = w*N + n is "dead"
    # (empty y interval) whenever column w is outside [x1[n], x2[n]].
    w_idx = jnp.arange(W, dtype=jnp.int32)[:, None]            # (W, 1)
    x_in = (w_idx >= x1[None, :]) & (w_idx <= x2[None, :])     # (W, N)
    y1_lane = jnp.where(x_in, y1[None, :], jnp.int32(2 ** 30)).reshape(1, L)
    y2_lane = jnp.where(x_in, y2[None, :], jnp.int32(-1)).reshape(1, L)

    # Per-row-tile schedule (scalar prefetch): `live[i]` marks tiles whose rows
    # intersect the global ROI y-band; dead tiles redirect their data fetch to
    # the last live (or 0th) block so consecutive dead tiles issue no new DMA.
    y_lo = jnp.min(y1_lane)
    y_hi = jnp.max(y2_lane)
    t_start = jnp.arange(n_row, dtype=jnp.int32) * jnp.int32(th)
    t_end = jnp.minimum(t_start + jnp.int32(th), jnp.int32(H)) - 1
    live = ((t_start <= y_hi) & (t_end >= y_lo)).astype(jnp.int32)     # (n_row,)
    idx = jnp.arange(n_row, dtype=jnp.int32)
    fetch_idx = jnp.maximum(
        jax.lax.cummax(jnp.where(live != 0, idx, jnp.int32(-1)), axis=0),
        jnp.int32(0)).astype(jnp.int32)                                # (n_row,)

    # Free reshape: merge trailing dims so the lane axis is W*N (lane-dense).
    data2d = data.reshape(H, L)

    # VMEM limit sized from need (double-buffered data + out blocks + y bounds)
    # with ~30% headroom, capped at 75% of physical VMEM for this generation.
    block_bytes = th * tl * itemsize
    need = 4 * block_bytes + 4 * tl * 4
    vmem_limit = int(min(budget, max(16 << 20, int(need * 1.3) + (2 << 20))))

    out2d = pl.pallas_call(
        _crop_split_gt_kernel,
        out_shape=jax.ShapeDtypeStruct((H, L), dtype),
        grid_spec=pltpu.PrefetchScalarGridSpec(
            num_scalar_prefetch=2,              # fetch_idx, live (SMEM)
            grid=(n_lane, n_row),               # row axis innermost -> dead-tile
                                                # fetch redirection elides DMAs
            in_specs=[
                pl.BlockSpec((1, tl), lambda j, i, fetch, live: (0, j)),        # y1
                pl.BlockSpec((1, tl), lambda j, i, fetch, live: (0, j)),        # y2
                pl.BlockSpec((th, tl), lambda j, i, fetch, live: (fetch[i], j)),  # data
            ],
            out_specs=pl.BlockSpec((th, tl), lambda j, i, fetch, live: (i, j)),
        ),
        compiler_params=pltpu.CompilerParams(
            dimension_semantics=("parallel", "parallel"),
            vmem_limit_bytes=vmem_limit),
    )(fetch_idx, live, y1_lane, y2_lane, data2d)

    return out2d.reshape(H, W, N)


class CropSplitGT:
    """Mirror of the PyTorch module (no parameters)."""

    def __init__(self, c=2):
        self.c = c

    def __call__(self, data, rois):
        return crop_split_gt(data, rois, self.c)


# -----------------------------------------------------------------------------
# Reference + self-test
# -----------------------------------------------------------------------------
def _reference(data, rois):
    """Plain-JAX reference (C-style int truncation of roi coords)."""
    H, W, N = data.shape
    hh = jnp.arange(H, dtype=jnp.int32)[:, None, None]
    ww = jnp.arange(W, dtype=jnp.int32)[None, :, None]
    r = rois.astype(jnp.float32).astype(jnp.int32)
    x1 = r[:, 0][None, None, :]
    y1 = r[:, 1][None, None, :]
    x2 = r[:, 2][None, None, :]
    y2 = r[:, 3][None, None, :]
    inside = (ww >= x1) & (ww <= x2) & (hh >= y1) & (hh <= y2)
    return jnp.where(inside, data, jnp.zeros((), data.dtype))


if __name__ == "__main__":
    key = jax.random.PRNGKey(0)

    def run_case(case_key, H, W, N, y_band):
        kd, kx, ky, kw = jax.random.split(case_key, 4)
        data = jax.random.uniform(kd, (H, W, N), dtype=jnp.float32)
        x1 = jax.random.uniform(kx, (N,), minval=0.0, maxval=W - 2.0)
        y1 = jax.random.uniform(ky, (N,), minval=y_band[0], maxval=y_band[1])
        wh = jax.random.uniform(kw, (N, 2), minval=1.0, maxval=12.0)
        x2 = jnp.minimum(x1 + wh[:, 0], W - 1.0)
        y2 = jnp.minimum(y1 + wh[:, 1], H - 1.0)
        rois = jnp.stack([x1, y1, x2, y2], axis=1).astype(jnp.float32)

        out = jax.block_until_ready(CropSplitGT(c=2)(data, rois))
        ref = _reference(data, rois)
        assert out.shape == (H, W, N)
        assert out.dtype == data.dtype
        assert jnp.array_equal(out, ref), f"mismatch vs reference (H={H},W={W},N={N})"

    k1, k2 = jax.random.split(key)
    # Case 1: ROIs spread over the image (all row tiles live, lane-split grid).
    run_case(k1, 64, 32, 8, (0.0, 62.0))
    # Case 2: tall image, ROIs confined to a narrow y-band (exercises the
    # dead-row-tile DMA skip and the zero-fill branch).
    run_case(k2, 512, 16, 8, (40.0, 56.0))

    print("KERNEL_OK")
</pallas_src>

<mosaic_0001>
module attributes {stable_mosaic.version = 11 : i64} {
  func.func @_crop_split_gt_kernel(%arg0: i32, %arg1: i32, %arg2: memref<1xi32, #tpu.memory_space<smem>>, %arg3: memref<1xi32, #tpu.memory_space<smem>>, %arg4: memref<1x128xi32, #tpu.memory_space<vmem>>, %arg5: memref<1x128xi32, #tpu.memory_space<vmem>>, %arg6: memref<64x128xf32, #tpu.memory_space<vmem>>, %arg7: memref<64x128xf32, #tpu.memory_space<vmem>>) attributes {dimension_semantics = [#tpu.dimension_semantics<parallel>, #tpu.dimension_semantics<parallel>], iteration_bounds = array<i64: 2, 1>, scalar_prefetch = 2 : i64, scratch_operands = 0 : i64, tpu.core_type = #tpu.core_type<tc>, window_params = [{transform_indices = @transform_0, window_bounds = array<i64: 1, 128>}, {transform_indices = @transform_1, window_bounds = array<i64: 1, 128>}, {transform_indices = @transform_2, window_bounds = array<i64: 64, 128>}, {transform_indices = @transform_3, window_bounds = array<i64: 64, 128>}]} {
    %c64_i32 = arith.constant 64 : i32
    %0 = arith.muli %arg1, %c64_i32 : i32
    %1 = arith.index_cast %arg1 : i32 to index
    %2 = memref.load %arg3[%1] : memref<1xi32, #tpu.memory_space<smem>>
    %c0_i32 = arith.constant 0 : i32
    %3 = arith.cmpi ne, %2, %c0_i32 : i32
    %4 = arith.extui %3 : i1 to i32
    %c0_i32_0 = arith.constant 0 : i32
    %5 = arith.cmpi ne, %4, %c0_i32_0 : i32
    scf.if %5 {
      %11 = tpu.iota {dimensions = array<i32: 0>} : vector<64x1xi32>
      %12 = vector.broadcast %0 : i32 to vector<64x1xi32>
      %13 = arith.addi %11, %12 : vector<64x1xi32>
      %c0 = arith.constant 0 : index
      %c0_3 = arith.constant 0 : index
      %14 = vector.load %arg4[%c0, %c0_3] : memref<1x128xi32, #tpu.memory_space<vmem>>, vector<1x128xi32>
      %15 = vector.broadcast %13 : vector<64x1xi32> to vector<64x128xi32>
      %16 = vector.broadcast %14 : vector<1x128xi32> to vector<64x128xi32>
      %17 = arith.cmpi sge, %15, %16 : vector<64x128xi32>
      %c0_4 = arith.constant 0 : index
      %c0_5 = arith.constant 0 : index
      %18 = vector.load %arg5[%c0_4, %c0_5] : memref<1x128xi32, #tpu.memory_space<vmem>>, vector<1x128xi32>
      %19 = vector.broadcast %13 : vector<64x1xi32> to vector<64x128xi32>
      %20 = vector.broadcast %18 : vector<1x128xi32> to vector<64x128xi32>
      %21 = arith.cmpi sle, %19, %20 : vector<64x128xi32>
      %22 = arith.andi %17, %21 : vector<64x128xi1>
      %c0_6 = arith.constant 0 : index
      %c0_7 = arith.constant 0 : index
      %23 = vector.load %arg6[%c0_6, %c0_7] : memref<64x128xf32, #tpu.memory_space<vmem>>, vector<64x128xf32>
      %cst = arith.constant 0.000000e+00 : f32
      %24 = vector.broadcast %cst : f32 to vector<64x128xf32>
      %25 = arith.select %22, %23, %24 : vector<64x128xi1>, vector<64x128xf32>
      %c0_8 = arith.constant 0 : index
      %c0_9 = arith.constant 0 : index
      %26 = vector.load %arg7[%c0_8, %c0_9] : memref<64x128xf32, #tpu.memory_space<vmem>>, vector<64x128xf32>
      tpu.vector_store %arg7[%c0_8, %c0_9], %25 {strides = array<i32>} : memref<64x128xf32, #tpu.memory_space<vmem>>, vector<64x128xf32>,
    } else {
    }
    %6 = arith.index_cast %arg1 : i32 to index
    %7 = memref.load %arg3[%6] : memref<1xi32, #tpu.memory_space<smem>>
    %c0_i32_1 = arith.constant 0 : i32
    %8 = arith.cmpi eq, %7, %c0_i32_1 : i32
    %9 = arith.extui %8 : i1 to i32
    %c0_i32_2 = arith.constant 0 : i32
    %10 = arith.cmpi ne, %9, %c0_i32_2 : i32
    scf.if %10 {
      %cst = arith.constant 0.000000e+00 : f32
      %11 = vector.broadcast %cst : f32 to vector<64x128xf32>
      %c0 = arith.constant 0 : index
      %c0_3 = arith.constant 0 : index
      %12 = vector.load %arg7[%c0, %c0_3] : memref<64x128xf32, #tpu.memory_space<vmem>>, vector<64x128xf32>
      tpu.vector_store %arg7[%c0, %c0_3], %11 {strides = array<i32>} : memref<64x128xf32, #tpu.memory_space<vmem>>, vector<64x128xf32>,
    } else {
    }
    return
  }
  func.func @transform_0(%arg0: i32, %arg1: i32, %arg2: memref<1xi32, #tpu.memory_space<smem>>, %arg3: memref<1xi32, #tpu.memory_space<smem>>) -> (i32, i32) {
    %c0_i32 = arith.constant 0 : i32
    %c0_i32_0 = arith.constant 0 : i32
    return %c0_i32, %arg0 : i32, i32
  }
  func.func @transform_1(%arg0: i32, %arg1: i32, %arg2: memref<1xi32, #tpu.memory_space<smem>>, %arg3: memref<1xi32, #tpu.memory_space<smem>>) -> (i32, i32) {
    %c0_i32 = arith.constant 0 : i32
    %c0_i32_0 = arith.constant 0 : i32
    return %c0_i32, %arg0 : i32, i32
  }
  func.func @transform_2(%arg0: i32, %arg1: i32, %arg2: memref<1xi32, #tpu.memory_space<smem>>, %arg3: memref<1xi32, #tpu.memory_space<smem>>) -> (i32, i32) {
    %0 = arith.index_cast %arg1 : i32 to index
    %1 = memref.load %arg2[%0] : memref<1xi32, #tpu.memory_space<smem>>
    %c0_i32 = arith.constant 0 : i32
    return %1, %arg0 : i32, i32
  }
  func.func @transform_3(%arg0: i32, %arg1: i32, %arg2: memref<1xi32, #tpu.memory_space<smem>>, %arg3: memref<1xi32, #tpu.memory_space<smem>>) -> (i32, i32) {
    %c0_i32 = arith.constant 0 : i32
    return %arg1, %arg0 : i32, i32
  }
}

</mosaic_0001>

<llo_original>
// kernel: tpu_custom_call.1
$region0: #{tpu_custom_call.1}
  #allocation0 [shape = 'u32[]', space=smem, size = 0x4, offset = 0x4, fixed_abs, tag = 'smem constant byte address 0x4 - core index']
  #allocation1 [shape = 'u32[144,128]{1,0:T(1,128)}', space=vmem, size = 0x12000, scoped, tag = 'internal scratch']
  #allocation2 [shape = 's32[1]{0}', space=sflag, size = 0x4, scoped, tag = 'scoped memory for tpu_custom_call.1']
  #allocation3 [shape = 's32[1]{0:T(128)S(6)}', space=smem, size = 0x200, scoped, tag = 'prefetched SMEM operand 0']
  #allocation4 [shape = 's32[1]{0:T(128)S(6)}', space=smem, size = 0x200, scoped, tag = 'prefetched SMEM operand 1']
  %s0 = inlined_call_operand.<no memory space> [shape: s32[1], index: 0, kind: input, shape index: {}]
  %s1 = inlined_call_operand.<no memory space> [shape: s32[1], index: 1, kind: input, shape index: {}]
  %s2 = inlined_call_operand.vmem [shape: s32[1,256], index: 2, kind: input, shape index: {}]
  %s3 = inlined_call_operand.vmem [shape: s32[1,256], index: 3, kind: input, shape index: {}]
  %s4 = inlined_call_operand.hbm [shape: f32[64,256], index: 4, kind: input, shape index: {}]
  %s5 = inlined_call_operand.hbm [shape: f32[64,256], index: 5, kind: output, shape index: {}]
  %s6 = sld [smem:[#allocation0]]
  $region57: #{tpu_custom_call.1} parent=0
    _
  %s8 = ssub.s32 1, %s6
  %s9 = scalar_select 0, %s8, %s6
  %10 = sst [smem:[#allocation3]] %s0
  %11 = sst [smem:[#allocation4]] %s1
  $region1: #{tpu_custom_call.1} parent=0
    #allocation5 [shape = 'u8[65536]{0}', space=vmem, size = 0x10000, scoped, tag = 'input window, operand 4']
    #allocation6 [shape = 's32[2]{0}', space=sflag, size = 0x8, scoped, tag = 'scoped memory for tpu_custom_call.1']
    #allocation7 [shape = 's32[2]{0}', space=sflag, size = 0x8, scoped, tag = 'scoped memory for tpu_custom_call.1']
    #allocation8 [shape = 'u8[65536]{0}', space=vmem, size = 0x10000, scoped, tag = 'output window, operand 0']
    %12 = vsyncpa [#allocation6], 0
    %s13 = scalar_lea.sflag [#allocation6], 1
    %14 = vsyncpa %s13, 0
    %15 = vsyncpa [#allocation7], 0
    %s16 = scalar_lea.sflag [#allocation7], 1
    %17 = vsyncpa %s16, 0
    loop: start=0, step=1, limit=4
    $region2: #{tpu_custom_call.1} parent=1 // loop_pre_header
      _
    $region3: #{tpu_custom_call.1} parent=1 // loop_header
      %s19 = sphi 0, %s23
      %p20 = scmp.ge.s32.totalorder %s19, 4
      %s26 = sphi 0, %s38
      %s27 = sphi 0, %s34
      %s28 = sphi 0, %s26
      %s29 = sphi 0, %s27
      %s30 = sphi 0, %s28
      %s31 = sphi 0, %s29
      %s41 = sphi 0, %s43
      %s44 = sphi 0, %s41
      %s45 = sphi 0, %s44
      %s61 = sphi 0, %s45
      %s67 = sphi 0, %s69
      %s70 = sphi 0, %s67
      %s71 = sphi 0, %s70
      %s87 = sphi 0, %s71
      %s97 = sphi 0, %s99
      %s100 = sphi 0, %s97
      %s101 = sphi 0, %s100
      %s117 = sphi 0, %s101
      %s125 = sphi 0, %s127
      %s128 = sphi 0, %s125
      %s129 = sphi 0, %s128
      %s145 = sphi 0, %s129
    $region4: #{tpu_custom_call.1} parent=1 // loop_header_branch
      %22 = sbr.rel (%p20) target = $region8
    $region5: #{tpu_custom_call.1} parent=1 // loop_body
      %s24 = ssub.s32 %s19, 1
      %s25 = ssub.s32 %s19, 2
      %s32 = sadd.s32 1, %s27
      %p33 = scmp.ge.s32.totalorder %s32, 1
      %s34 = scalar_select %p33, 0, %s32
      %s35 = sadd.s32 1, %s26
      %s36 = scalar_select %p33, %s35, %s26
      %p37 = scmp.ge.s32.totalorder %s36, 2
      %s38 = scalar_select %p37, 0, %s36
      %s39 = ssub.s32 %s26, %s38
      %p40 = scmp.eq.s32.totalorder %s39, 0
      %s42 = sadd.s32 %s41, 1
      %s43 = scalar_select %p40, %s41, %s42
      %p46 = pneg %p40
      %p47 = scmp.eq.s32.totalorder %s19, 1
      %p48 = por %p46, %p47
      %p49 = scmp.ne.s32.totalorder %s41, %s44
      %p50 = scmp.eq.s32.totalorder %s19, 0
      %p51 = por %p49, %p50
      %p52 = scmp.ne.s32.totalorder %s41, %s44
      %p53 = scmp.eq.s32.totalorder %s24, 1
      %p54 = por %p52, %p53
      %p55 = scmp.ne.s32.totalorder %s44, %s45
      %p56 = scmp.eq.s32.totalorder %s24, 0
      %p57 = por %p55, %p56
      %p58 = scmp.ne.s32.totalorder %s44, %s45
      %p59 = scmp.eq.s32.totalorder %s25, 1
      %p60 = por %p58, %p59
      %p62 = scmp.ne.s32.totalorder %s45, %s61
      %p63 = scmp.eq.s32.totalorder %s25, 0
      %p64 = por %p62, %p63
      %s65 = ssub.s32 %s26, %s38
      %p66 = scmp.eq.s32.totalorder %s65, 0
      %s68 = sadd.s32 %s67, 1
      %s69 = scalar_select %p66, %s67, %s68
      %p72 = pneg %p66
      %p73 = scmp.eq.s32.totalorder %s19, 1
      %p74 = por %p72, %p73
      %p75 = scmp.ne.s32.totalorder %s67, %s70
      %p76 = scmp.eq.s32.totalorder %s19, 0
      %p77 = por %p75, %p76
      %p78 = scmp.ne.s32.totalorder %s67, %s70
      %p79 = scmp.eq.s32.totalorder %s24, 1
      %p80 = por %p78, %p79
      %p81 = scmp.ne.s32.totalorder %s70, %s71
      %p82 = scmp.eq.s32.totalorder %s24, 0
      %p83 = por %p81, %p82
      %p84 = scmp.ne.s32.totalorder %s70, %s71
      %p85 = scmp.eq.s32.totalorder %s25, 1
      %p86 = por %p84, %p85
      %p88 = scmp.ne.s32.totalorder %s71, %s87
      %p89 = scmp.eq.s32.totalorder %s25, 0
      %p90 = por %p88, %p89
      %s91 = sld [smem:[#allocation3 + %s27]]
      %s92 = sld [smem:[#allocation3 + %s34]]
      %s93 = ssub.s32 %s91, %s92
      %s94 = ssub.s32 %s26, %s38
      %s95 = sor.u32 %s93, %s94
      %p96 = scmp.eq.s32.totalorder %s95, 0
      %s98 = sadd.s32 %s97, 1
      %s99 = scalar_select %p96, %s97, %s98
      %p102 = pneg %p96
      %p103 = scmp.eq.s32.totalorder %s19, 1
      %p104 = por %p102, %p103
      %p105 = scmp.ne.s32.totalorder %s97, %s100
      %p106 = scmp.eq.s32.totalorder %s19, 0
      %p107 = por %p105, %p106
      %p108 = scmp.ne.s32.totalorder %s97, %s100
      %p109 = scmp.eq.s32.totalorder %s24, 1
      %p110 = por %p108, %p109
      %p111 = scmp.ne.s32.totalorder %s100, %s101
      %p112 = scmp.eq.s32.totalorder %s24, 0
      %p113 = por %p111, %p112
      %p114 = scmp.ne.s32.totalorder %s100, %s101
      %p115 = scmp.eq.s32.totalorder %s25, 1
      %p116 = por %p114, %p115
      %p118 = scmp.ne.s32.totalorder %s101, %s117
      %p119 = scmp.eq.s32.totalorder %s25, 0
      %p120 = por %p118, %p119
      %s121 = ssub.s32 %s27, %s34
      %s122 = ssub.s32 %s26, %s38
      %s123 = sor.u32 %s121, %s122
      %p124 = scmp.eq.s32.totalorder %s123, 0
      %s126 = sadd.s32 %s125, 1
      %s127 = scalar_select %p124, %s125, %s126
      %p130 = pneg %p124
      %p131 = scmp.eq.s32.totalorder %s19, 1
      %p132 = por %p130, %p131
      %p133 = scmp.ne.s32.totalorder %s125, %s128
      %p134 = scmp.eq.s32.totalorder %s19, 0
      %p135 = por %p133, %p134
      %p136 = scmp.ne.s32.totalorder %s125, %s128
      %p137 = scmp.eq.s32.totalorder %s24, 1
      %p138 = por %p136, %p137
      %p139 = scmp.ne.s32.totalorder %s128, %s129
      %p140 = scmp.eq.s32.totalorder %s24, 0
      %p141 = por %p139, %p140
      %p142 = scmp.ne.s32.totalorder %s128, %s129
      %p143 = scmp.eq.s32.totalorder %s25, 1
      %p144 = por %p142, %p143
      %p146 = scmp.ne.s32.totalorder %s129, %s145
      %p147 = scmp.eq.s32.totalorder %s25, 0
      %p148 = por %p146, %p147
      %p149 = scmp.le.s32.totalorder 1, %s19
      %p150 = scmp.lt.s32.totalorder %s19, 3
      %p151 = pnand %p149, %p150
      %p152 = pneg %p151
      // Predicated region
      $region9: #{tpu_custom_call.1} parent=5 // pred_check
        _
      $region10: #{tpu_custom_call.1} parent=5 // pred_check_branch
        %154 = sbr.rel (%p151) target = $region12
      $region11: #{tpu_custom_call.1} parent=5 // pred_region
        %s155 = ssub.s32 %s19, 1
      $region12: #{tpu_custom_call.1} parent=5 // pred_fallthru
        _
      %p156 = scmp.lt.s32.totalorder %s19, 2
      // Predicated region
      $region13: #{tpu_custom_call.1} parent=5 // pred_check
        %p157 = pneg %p156
      $region14: #{tpu_custom_call.1} parent=5 // pred_check_branch
        %159 = sbr.rel (%p157) target = $region16
      $region15: #{tpu_custom_call.1} parent=5 // pred_region
        // Predicated region
        $region17: #{tpu_custom_call.1} parent=15 // pred_check
          %p160 = pneg %p51
        $region18: #{tpu_custom_call.1} parent=15 // pred_check_branch
          %162 = sbr.rel (%p160) target = $region20
        $region19: #{tpu_custom_call.1} parent=15 // pred_region
          %p163 = scmp.lt.s32.totalorder %s26, 1
          %s164 = scalar_select %p163, %s26, 1
          %s165 = scalar_lea.vmem %s2, %s164
        $region20: #{tpu_custom_call.1} parent=15 // pred_fallthru
          _
        // Predicated region
        $region21: #{tpu_custom_call.1} parent=15 // pred_check
          %p166 = pneg %p77
        $region22: #{tpu_custom_call.1} parent=15 // pred_check_branch
          %168 = sbr.rel (%p166) target = $region24
        $region23: #{tpu_custom_call.1} parent=15 // pred_region
          %p169 = scmp.lt.s32.totalorder %s26, 1
          %s170 = scalar_select %p169, %s26, 1
          %s171 = scalar_lea.vmem %s3, %s170
        $region24: #{tpu_custom_call.1} parent=15 // pred_fallthru
          _
        // Predicated region
        $region25: #{tpu_custom_call.1} parent=15 // pred_check
          %p172 = pneg %p107
        $region26: #{tpu_custom_call.1} parent=15 // pred_check_branch
          %174 = sbr.rel (%p172) target = $region28
        $region27: #{tpu_custom_call.1} parent=15 // pred_region
          %s175 = sand.u32 %s97, 1
          %s176 = scalar_lea.sflag [#allocation6], %s175
          %s177 = sand.u32 %s97, 1
          %s178 = smul.addr %s177, 64
          %s179 = scalar_lea.vmem [#allocation5], %s178
          %s180 = sld [smem:[#allocation3 + %s27]]
          %s181 = smul.u32 8, %s180
          %s183 = ssub.s32 1024, 1024
          %184 = vsyncadd %s176, %s183
          %s185 = smul.addr %s181, 2
          %s186 = sadd.s32 %s26, %s185
          %s187 = smul.addr %s186, 128
          %s188 = scalar_lea.hbm %s4, %s187
          %s189 = sshll.u32 %s179, 4
          %s190 = int_to_ptr.vmem [resolvable:$true] %s189
          %195 = dma.hbm_to_vmem [thread:$0]  %s188, 1024, %s190, %s176, 256, 128, 8
        $region28: #{tpu_custom_call.1} parent=15 // pred_fallthru
          _
      $region16: #{tpu_custom_call.1} parent=5 // pred_fallthru
        _
      %p196 = scmp.le.s32.totalorder 1, %s19
      %p197 = scmp.lt.s32.totalorder %s19, 3
      %p198 = pnand %p196, %p197
      %p199 = pneg %p198
      // Predicated region
      $region29: #{tpu_custom_call.1} parent=5 // pred_check
        _
      $region30: #{tpu_custom_call.1} parent=5 // pred_check_branch
        %201 = sbr.rel (%p198) target = $region32
      $region31: #{tpu_custom_call.1} parent=5 // pred_region
        %s202 = ssub.s32 %s19, 1
        %s203 = sand.u32 %s100, 1
        %s204 = scalar_lea.sflag [#allocation6], %s203
        %s205 = sand.u32 %s100, 1
        %s206 = smul.addr %s205, 64
        %s207 = scalar_lea.vmem [#allocation5], %s206
        // Predicated region
        $region33: #{tpu_custom_call.1} parent=31 // pred_check
          %p208 = pneg %p113
        $region34: #{tpu_custom_call.1} parent=31 // pred_check_branch
          %210 = sbr.rel (%p208) target = $region36
        $region35: #{tpu_custom_call.1} parent=31 // pred_region
          %211 = dma.done %s204, 1024
        $region36: #{tpu_custom_call.1} parent=31 // pred_fallthru
          _
        %p212 = scmp.lt.s32.totalorder %s28, 1
        %s213 = scalar_select %p212, %s28, 1
        %s214 = scalar_lea.vmem %s2, %s213
        %p215 = pneg %p57
        %p216 = pneg %p54
        %p217 = scmp.lt.s32.totalorder %s28, 1
        %s218 = scalar_select %p217, %s28, 1
        %s219 = scalar_lea.vmem %s3, %s218
        %p220 = pneg %p83
        %p221 = pneg %p80
        %s222 = sand.u32 %s100, 1
        %s223 = scalar_lea.sflag [#allocation6], %s222
        %s224 = sand.u32 %s100, 1
        %s225 = smul.addr %s224, 64
        %s226 = scalar_lea.vmem [#allocation5], %s225
        %p227 = pneg %p113
        %p228 = pneg %p110
        %p229 = pneg %p141
        %p230 = pneg %p138
        %s231 = sand.u32 %s128, 1
        %s232 = scalar_lea.sflag [#allocation7], %s231
        %s233 = sand.u32 %s128, 1
        %s234 = smul.addr %s233, 64
        %s235 = scalar_lea.vmem [#allocation8], %s234
        %p236 = scmp.lt.s32.totalorder %s28, 1
        %s237 = scalar_select %p236, %s28, 1
        %s238 = scalar_lea.vmem %s2, %s237
        %p239 = scmp.lt.s32.totalorder %s28, 1
        %s240 = scalar_select %p239, %s28, 1
        %s241 = scalar_lea.vmem %s3, %s240
        %s242 = sld [smem:[#allocation3 + %s29]]
        %s243 = smul.u32 8, %s242
        %s244 = smul.u32 8, %s29
        %s245 = smul.u32 %s29, 64
        %s246 = sld [smem:[#allocation4 + %s29]]
        %p247 = scmp.ne.s32.totalorder %s246, 0
        // Predicated region
        $region37: #{tpu_custom_call.1} parent=31 // pred_check
          %p248 = pneg %p247
        $region38: #{tpu_custom_call.1} parent=31 // pred_check_branch
          %250 = sbr.rel (%p248) target = $region40
        $region39: #{tpu_custom_call.1} parent=31 // pred_region
          %v251 = vlaneseq
          %v252 = vshrl.u32 %v251, 7
          %v253 = vadd.s32 %v252, 8
          %v254 = vadd.s32 %v252, 16
          %v255 = vadd.s32 %v252, 24
          %v256 = vadd.s32 %v252, 32
          %v257 = vadd.s32 %v252, 40
          %v258 = vadd.s32 %v252, 48
          %v259 = vadd.s32 %v252, 56
          %v260 = vstv %s245
          %v261 = vadd.s32 %v252, %v260
          %v262 = vadd.s32 %v253, %v260
          %v263 = vadd.s32 %v254, %v260
          %v264 = vadd.s32 %v255, %v260
          %v265 = vadd.s32 %v256, %v260
          %v266 = vadd.s32 %v257, %v260
          %v267 = vadd.s32 %v258, %v260
          %v268 = vadd.s32 %v259, %v260
          %v269 = vld [vmem:[%s238] sm:$0x1]
          %v270 = vlaneseq
          %v271 = vshrl.u32 %v270, 7
          %v272 = vsub.s32 0, %v271
          %v273 = vrot.slane %v269, %v272
          %vm274 = vcmp.ge.s32.totalorder %v261, %v273
          %vm275 = vcmp.ge.s32.totalorder %v262, %v273
          %vm276 = vcmp.ge.s32.totalorder %v263, %v273
          %vm277 = vcmp.ge.s32.totalorder %v264, %v273
          %vm278 = vcmp.ge.s32.totalorder %v265, %v273
          %vm279 = vcmp.ge.s32.totalorder %v266, %v273
          %vm280 = vcmp.ge.s32.totalorder %v267, %v273
          %vm281 = vcmp.ge.s32.totalorder %v268, %v273
          %v282 = vld [vmem:[%s241] sm:$0x1]
          %v283 = vlaneseq
          %v284 = vshrl.u32 %v283, 7
          %v285 = vsub.s32 0, %v284
          %v286 = vrot.slane %v282, %v285
          %vm287 = vcmp.le.s32.totalorder %v261, %v286
          %vm288 = vcmp.le.s32.totalorder %v262, %v286
          %vm289 = vcmp.le.s32.totalorder %v263, %v286
          %vm290 = vcmp.le.s32.totalorder %v264, %v286
          %vm291 = vcmp.le.s32.totalorder %v265, %v286
          %vm292 = vcmp.le.s32.totalorder %v266, %v286
          %vm293 = vcmp.le.s32.totalorder %v267, %v286
          %vm294 = vcmp.le.s32.totalorder %v268, %v286
          %vm295 = vmand %vm274, %vm287
          %vm296 = vmand %vm275, %vm288
          %vm297 = vmand %vm276, %vm289
          %vm298 = vmand %vm277, %vm290
          %vm299 = vmand %vm278, %vm291
          %vm300 = vmand %vm279, %vm292
          %vm301 = vmand %vm280, %vm293
          %vm302 = vmand %vm281, %vm294
          %v303 = vld [vmem:[%s207] sm:$0xff]
          %v304 = vld [vmem:[%s207 + $0x8] sm:$0xff]
          %v305 = vld [vmem:[%s207 + $0x10] sm:$0xff]
          %v306 = vld [vmem:[%s207 + $0x18] sm:$0xff]
          %v307 = vld [vmem:[%s207 + $0x20] sm:$0xff]
          %v308 = vld [vmem:[%s207 + $0x28] sm:$0xff]
          %v309 = vld [vmem:[%s207 + $0x30] sm:$0xff]
          %v310 = vld [vmem:[%s207 + $0x38] sm:$0xff]
          %v311 = vsel %vm295, %v303, 0.0
          %v312 = vsel %vm296, %v304, 0.0
          %v313 = vsel %vm297, %v305, 0.0
          %v314 = vsel %vm298, %v306, 0.0
          %v315 = vsel %vm299, %v307, 0.0
          %v316 = vsel %vm300, %v308, 0.0
          %v317 = vsel %vm301, %v309, 0.0
          %v318 = vsel %vm302, %v310, 0.0
          %319 = vst [vmem:[%s235] sm:$0xff] %v311
          %320 = vst [vmem:[%s235 + $0x8] sm:$0xff] %v312
          %321 = vst [vmem:[%s235 + $0x10] sm:$0xff] %v313
          %322 = vst [vmem:[%s235 + $0x18] sm:$0xff] %v314
          %323 = vst [vmem:[%s235 + $0x20] sm:$0xff] %v315
          %324 = vst [vmem:[%s235 + $0x28] sm:$0xff] %v316
          %325 = vst [vmem:[%s235 + $0x30] sm:$0xff] %v317
          %326 = vst [vmem:[%s235 + $0x38] sm:$0xff] %v318
        $region40: #{tpu_custom_call.1} parent=31 // pred_fallthru
          _
        %s327 = sld [smem:[#allocation4 + %s29]]
        %p328 = scmp.eq.s32.totalorder %s327, 0
        // Predicated region
        $region41: #{tpu_custom_call.1} parent=31 // pred_check
          %p329 = pneg %p328
        $region42: #{tpu_custom_call.1} parent=31 // pred_check_branch
          %331 = sbr.rel (%p329) target = $region44
        $region43: #{tpu_custom_call.1} parent=31 // pred_region
          %332 = vst [vmem:[%s235] sm:$0xff] 0.0
          %333 = vst [vmem:[%s235 + $0x8] sm:$0xff] 0.0
          %334 = vst [vmem:[%s235 + $0x10] sm:$0xff] 0.0
          %335 = vst [vmem:[%s235 + $0x18] sm:$0xff] 0.0
          %336 = vst [vmem:[%s235 + $0x20] sm:$0xff] 0.0
          %337 = vst [vmem:[%s235 + $0x28] sm:$0xff] 0.0
          %338 = vst [vmem:[%s235 + $0x30] sm:$0xff] 0.0
          %339 = vst [vmem:[%s235 + $0x38] sm:$0xff] 0.0
        $region44: #{tpu_custom_call.1} parent=31 // pred_fallthru
          _
        %s340 = sand.u32 %s128, 1
        %s341 = scalar_lea.sflag [#allocation7], %s340
        %s342 = sand.u32 %s128, 1
        %s343 = smul.addr %s342, 64
        %s344 = scalar_lea.vmem [#allocation8], %s343
        // Predicated region
        $region45: #{tpu_custom_call.1} parent=31 // pred_check
          %p345 = pneg %p138
        $region46: #{tpu_custom_call.1} parent=31 // pred_check_branch
          %347 = sbr.rel (%p345) target = $region48
        $region47: #{tpu_custom_call.1} parent=31 // pred_region
          %s348 = smul.u32 8, %s29
          %s350 = ssub.s32 1024, 1024
          %351 = vsyncadd %s341, %s350
          %s352 = smul.addr %s348, 2
          %s353 = sadd.s32 %s28, %s352
          %s354 = smul.addr %s353, 128
          %s355 = scalar_lea.hbm %s5, %s354
          %s356 = sshll.u32 %s344, 4
          %s357 = int_to_ptr.vmem [resolvable:$true] %s356
          %362 = dma.vmem_to_hbm [thread:$0]  %s357, 1024, %s355, %s341, 128, 256, 8
        $region48: #{tpu_custom_call.1} parent=31 // pred_fallthru
          _
      $region32: #{tpu_custom_call.1} parent=5 // pred_fallthru
        _
      %p363 = scmp.le.s32.totalorder 2, %s19
      // Predicated region
      $region49: #{tpu_custom_call.1} parent=5 // pred_check
        %p364 = pneg %p363
      $region50: #{tpu_custom_call.1} parent=5 // pred_check_branch
        %366 = sbr.rel (%p364) target = $region52
      $region51: #{tpu_custom_call.1} parent=5 // pred_region
        %s367 = ssub.s32 %s19, 2
        // Predicated region
        $region53: #{tpu_custom_call.1} parent=51 // pred_check
          %p368 = pneg %p144
        $region54: #{tpu_custom_call.1} parent=51 // pred_check_branch
          %370 = sbr.rel (%p368) target = $region56
        $region55: #{tpu_custom_call.1} parent=51 // pred_region
          %s371 = sand.u32 %s129, 1
          %s372 = scalar_lea.sflag [#allocation7], %s371
          %s373 = sand.u32 %s129, 1
          %s374 = smul.addr %s373, 64
          %s375 = scalar_lea.vmem [#allocation8], %s374
          %376 = dma.done %s372, 1024
        $region56: #{tpu_custom_call.1} parent=51 // pred_fallthru
          _
      $region52: #{tpu_custom_call.1} parent=5 // pred_fallthru
        _
    $region6: #{tpu_custom_call.1} parent=1 // loop_footer
      %s23 = sadd.s32 1, %s19
    $region7: #{tpu_custom_call.1} parent=1 // loop_footer_branch
      %18 = sbr.rel target = $region3
    $region8: #{tpu_custom_call.1} parent=1 // loop_exit
      _
    %377 = vsyncpa [#allocation6], 1
    %s378 = scalar_lea.sflag [#allocation6], 1
    %379 = vsyncpa %s378, 1
    %380 = vsyncpa [#allocation7], 1
    %s381 = scalar_lea.sflag [#allocation7], 1
    %382 = vsyncpa %s381, 1

</llo_original>
